<compile_context>
chip_gen: v5e
topology: v5e:2x2
jax: 0.10.0
libtpu: 0.0.40
codegen_flags: <defaults>
</compile_context>

<pallas_src>
import functools

import jax
import jax.numpy as jnp
from jax.experimental import pallas as pl
from jax.experimental.pallas import tpu as pltpu


# Target bytes per input block (f32); keeps double-buffered inputs well inside
# v5e's 16 MiB default scoped VMEM while staying in the saturated-DMA regime.
_TARGET_BLOCK_BYTES = 2 * 1024 * 1024


def _sse_kernel(p_ref, t_ref, loss_ref, acc_ref, *, scale, tile_rows,
                valid_rows_last):
    """Accumulate sum((p - t)^2) into a (1, LANE) VMEM accumulator."""
    step = pl.program_id(0)
    n_steps = pl.num_programs(0)

    @pl.when(step == 0)
    def _():
        acc_ref[...] = jnp.zeros_like(acc_ref)

    d = p_ref[...].astype(jnp.float32) - t_ref[...].astype(jnp.float32)
    sq = d * d

    # Only the last grid step can be ragged; this branch is statically removed
    # when rows divide evenly (no per-step mask cost in that case).
    if valid_rows_last != tile_rows:
        limit = jnp.where(step == n_steps - 1, valid_rows_last, tile_rows)
        row_ids = jax.lax.broadcasted_iota(jnp.int32, sq.shape, 0)
        sq = jnp.where(row_ids < limit, sq, 0.0)

    # Sublane reduce (XLU/VPU) -> per-lane partials; tiny accumulator RMW.
    acc_ref[...] += jnp.sum(sq, axis=0, keepdims=True)

    @pl.when(step == n_steps - 1)
    def _():
        total = jnp.sum(acc_ref[...], keepdims=True)          # (1, 1) f32
        loss_ref[...] = total * jnp.float32(scale)


def custom_mse_loss(predicted, target):
    """Pallas equivalent of CustomMSELoss.forward. Returns a scalar float32."""
    assert predicted.shape == target.shape, "shapes must match (same as F.mse_loss)"
    n_elems = predicted.size
    scale = 10000.0 / float(n_elems)

    # Pick the widest lane-dense last dim (multiple of 128) that divides N.
    lane = None
    for cand in (512, 256, 128):
        if n_elems % cand == 0:
            lane = cand
            break
    if lane is None:
        # TODO(synk): element counts not divisible by 128 fall back to plain XLA.
        d = predicted.astype(jnp.float32) - target.astype(jnp.float32)
        return jnp.mean(d * d) * jnp.float32(10000.0)

    # Contiguous reshapes: no HBM copy, no padding.
    p2 = predicted.reshape(-1, lane)
    t2 = target.reshape(-1, lane)
    rows = p2.shape[0]

    # ~2 MiB f32 block per input, rows a multiple of 16 (bf16-safe sublanes).
    max_tile_rows = max(16, (_TARGET_BLOCK_BYTES // (4 * lane)) // 16 * 16)
    if rows <= max_tile_rows:
        # Small-input fast path: whole tensor in one block, grid=(1,).
        tile_rows = rows
    else:
        tile_rows = max_tile_rows
    grid_n = (rows + tile_rows - 1) // tile_rows
    valid_rows_last = rows - (grid_n - 1) * tile_rows

    kernel = functools.partial(
        _sse_kernel,
        scale=scale,
        tile_rows=tile_rows,
        valid_rows_last=valid_rows_last,
    )

    loss = pl.pallas_call(
        kernel,
        out_shape=jax.ShapeDtypeStruct((1, 1), jnp.float32),
        grid_spec=pltpu.PrefetchScalarGridSpec(
            num_scalar_prefetch=0,
            grid=(grid_n,),
            in_specs=[
                pl.BlockSpec((tile_rows, lane), lambda i: (i, 0)),
                pl.BlockSpec((tile_rows, lane), lambda i: (i, 0)),
            ],
            out_specs=pl.BlockSpec((1, 1), lambda i: (0, 0)),
            scratch_shapes=[pltpu.VMEM((1, lane), jnp.float32)],
        ),
        compiler_params=pltpu.CompilerParams(
            dimension_semantics=("arbitrary",),
        ),
    )(p2, t2)

    return loss[0, 0]


if __name__ == "__main__":
    key = jax.random.PRNGKey(0)
    k1, k2, k3, k4 = jax.random.split(key, 4)

    # Small NCHW prediction/target pair (single-block fast path, grid=(1,)).
    B, C, H, W = 2, 4, 16, 16
    predicted = jax.random.normal(k1, (B, C, H, W), dtype=jnp.float32)
    target = jax.random.normal(k2, (B, C, H, W), dtype=jnp.float32)

    loss = jax.block_until_ready(custom_mse_loss(predicted, target))
    ref = jnp.mean((predicted - target) ** 2) * 10000.0
    assert jnp.allclose(loss, ref, rtol=1e-5, atol=1e-3), (loss, ref)

    # Larger shape exercising the tiled multi-block path with a ragged tail
    # (rows = 1152 -> grid = 2 with tile_rows = 1024, last block 128 rows).
    B2, C2, H2, W2 = 1, 4, 384, 384
    p_big = jax.random.normal(k3, (B2, C2, H2, W2), dtype=jnp.float32)
    t_big = jax.random.normal(k4, (B2, C2, H2, W2), dtype=jnp.float32)

    loss_big = jax.block_until_ready(custom_mse_loss(p_big, t_big))
    ref_big = jnp.mean((p_big - t_big) ** 2) * 10000.0
    assert jnp.allclose(loss_big, ref_big, rtol=1e-4), (loss_big, ref_big)

    print("KERNEL_OK")
</pallas_src>

<mosaic_0001>
module attributes {stable_mosaic.version = 11 : i64} {
  func.func @_sse_kernel(%arg0: i32, %arg1: memref<4x512xf32, #tpu.memory_space<vmem>>, %arg2: memref<4x512xf32, #tpu.memory_space<vmem>>, %arg3: memref<1x1xf32, #tpu.memory_space<vmem>>, %arg4: memref<1x512xf32, #tpu.memory_space<vmem>>) attributes {dimension_semantics = [#tpu.dimension_semantics<arbitrary>], iteration_bounds = array<i64: 1>, scalar_prefetch = 0 : i64, scratch_operands = 1 : i64, tpu.core_type = #tpu.core_type<tc>, window_params = [{transform_indices = @transform_0, window_bounds = array<i64: 4, 512>}, {transform_indices = @transform_1, window_bounds = array<i64: 4, 512>}, {pipeline_mode = #tpu.pipeline_mode<synchronous>, transform_indices = @transform_2, window_bounds = array<i64: 1, 1>}]} {
    %c0_i32 = arith.constant 0 : i32
    %0 = arith.cmpi eq, %arg0, %c0_i32 : i32
    %1 = arith.extui %0 : i1 to i32
    %c0_i32_0 = arith.constant 0 : i32
    %2 = arith.cmpi ne, %1, %c0_i32_0 : i32
    scf.if %2 {
      %cst_10 = arith.constant 0.000000e+00 : f32
      %15 = vector.broadcast %cst_10 : f32 to vector<1x512xf32>
      %c0_11 = arith.constant 0 : index
      %c0_12 = arith.constant 0 : index
      %16 = vector.load %arg4[%c0_11, %c0_12] : memref<1x512xf32, #tpu.memory_space<vmem>>, vector<1x512xf32>
      tpu.vector_store %arg4[%c0_11, %c0_12], %15 {strides = array<i32>} : memref<1x512xf32, #tpu.memory_space<vmem>>, vector<1x512xf32>,
    } else {
    }
    %c0 = arith.constant 0 : index
    %c0_1 = arith.constant 0 : index
    %3 = vector.load %arg1[%c0, %c0_1] : memref<4x512xf32, #tpu.memory_space<vmem>>, vector<4x512xf32>
    %c0_2 = arith.constant 0 : index
    %c0_3 = arith.constant 0 : index
    %4 = vector.load %arg2[%c0_2, %c0_3] : memref<4x512xf32, #tpu.memory_space<vmem>>, vector<4x512xf32>
    %5 = arith.subf %3, %4 : vector<4x512xf32>
    %6 = arith.mulf %5, %5 : vector<4x512xf32>
    %c0_4 = arith.constant 0 : index
    %c0_5 = arith.constant 0 : index
    %7 = vector.load %arg4[%c0_4, %c0_5] : memref<1x512xf32, #tpu.memory_space<vmem>>, vector<1x512xf32>
    %cst = arith.constant dense<0.000000e+00> : vector<512xf32>
    %8 = vector.multi_reduction <add>, %6, %cst [0] : vector<4x512xf32> to vector<512xf32>
    %9 = vector.shape_cast %8 : vector<512xf32> to vector<1x512xf32>
    %10 = arith.addf %7, %9 : vector<1x512xf32>
    %c0_6 = arith.constant 0 : index
    %c0_7 = arith.constant 0 : index
    %11 = vector.load %arg4[%c0_6, %c0_7] : memref<1x512xf32, #tpu.memory_space<vmem>>, vector<1x512xf32>
    tpu.vector_store %arg4[%c0_6, %c0_7], %10 {strides = array<i32>} : memref<1x512xf32, #tpu.memory_space<vmem>>, vector<1x512xf32>,
    %c0_i32_8 = arith.constant 0 : i32
    %12 = arith.cmpi eq, %arg0, %c0_i32_8 : i32
    %13 = arith.extui %12 : i1 to i32
    %c0_i32_9 = arith.constant 0 : i32
    %14 = arith.cmpi ne, %13, %c0_i32_9 : i32
    scf.if %14 {
      %c0_10 = arith.constant 0 : index
      %c0_11 = arith.constant 0 : index
      %15 = vector.load %arg4[%c0_10, %c0_11] : memref<1x512xf32, #tpu.memory_space<vmem>>, vector<1x512xf32>
      %16 = vector.shape_cast %15 : vector<1x512xf32> to vector<1x1x512xf32>
      %cst_12 = arith.constant dense<0.000000e+00> : vector<1xf32>
      %17 = vector.multi_reduction <add>, %16, %cst_12 [1, 2] : vector<1x1x512xf32> to vector<1xf32>
      %18 = vector.shape_cast %17 : vector<1xf32> to vector<1x1x1xf32>
      %19 = vector.extract %18[0, 0, 0] : f32 from vector<1x1x1xf32>
      %20 = vector.broadcast %19 : f32 to vector<1x1xf32>
      %cst_13 = arith.constant 4.8828125 : f32
      %21 = vector.broadcast %cst_13 : f32 to vector<1x1xf32>
      %22 = arith.mulf %20, %21 : vector<1x1xf32>
      %c0_14 = arith.constant 0 : index
      %c0_15 = arith.constant 0 : index
      %23 = vector.load %arg3[%c0_14, %c0_15] : memref<1x1xf32, #tpu.memory_space<vmem>>, vector<1x1xf32>
      tpu.vector_store %arg3[%c0_14, %c0_15], %22 {strides = array<i32>} : memref<1x1xf32, #tpu.memory_space<vmem>>, vector<1x1xf32>,
    } else {
    }
    return
  }
  func.func @transform_0(%arg0: i32) -> (i32, i32) {
    %c0_i32 = arith.constant 0 : i32
    %c0_i32_0 = arith.constant 0 : i32
    return %arg0, %c0_i32 : i32, i32
  }
  func.func @transform_1(%arg0: i32) -> (i32, i32) {
    %c0_i32 = arith.constant 0 : i32
    %c0_i32_0 = arith.constant 0 : i32
    return %arg0, %c0_i32 : i32, i32
  }
  func.func @transform_2(%arg0: i32) -> (i32, i32) {
    %c0_i32 = arith.constant 0 : i32
    %c0_i32_0 = arith.constant 0 : i32
    %c0_i32_1 = arith.constant 0 : i32
    return %c0_i32, %c0_i32_0 : i32, i32
  }
}

</mosaic_0001>

<llo_original>
// kernel: tpu_custom_call.1
$region0: #{tpu_custom_call.1}
  #allocation0 [shape = 'u32[]', space=smem, size = 0x4, offset = 0x4, fixed_abs, tag = 'smem constant byte address 0x4 - core index']
  #allocation1 [shape = 'u32[72,128]{1,0:T(1,128)}', space=vmem, size = 0x9000, scoped, tag = 'internal scratch']
  #allocation2 [shape = 'f32[1,512]{1,0:T(1,128)}', space=vmem, size = 0x800, scoped, tag = 'scratch operand']
  %s0 = inlined_call_operand.hbm [shape: f32[4,512], index: 0, kind: input, shape index: {}]
  %s1 = inlined_call_operand.hbm [shape: f32[4,512], index: 1, kind: input, shape index: {}]
  %s2 = inlined_call_operand.hbm [shape: f32[1,1], index: 2, kind: output, shape index: {}]
  %s3 = sld [smem:[#allocation0]]
  $region34: #{tpu_custom_call.1} parent=0
    _
  %s5 = ssub.s32 1, %s3
  %s6 = scalar_select 0, %s5, %s3
  $region1: #{tpu_custom_call.1} parent=0
    #allocation3 [shape = 'u8[8192]{0}', space=vmem, size = 0x2000, scoped, tag = 'input window, operand 0, single buffered']
    #allocation4 [shape = 's32[1]{0}', space=sflag, size = 0x4, scoped, tag = 'scoped memory for tpu_custom_call.1']
    #allocation5 [shape = 's32[1]{0}', space=sflag, size = 0x4, scoped, tag = 'scoped memory for tpu_custom_call.1']
    #allocation6 [shape = 'u8[8192]{0}', space=vmem, size = 0x2000, scoped, tag = 'input window, operand 1, single buffered']
    #allocation7 [shape = 's32[1]{0}', space=sflag, size = 0x4, scoped, tag = 'scoped memory for tpu_custom_call.1']
    #allocation8 [shape = 'u8[512]{0}', space=vmem, size = 0x400, scoped, tag = 'output window, operand 0, single buffered']
    %7 = vsyncpa [#allocation4], 0
    %8 = vsyncpa [#allocation7], 0
    %9 = vsyncpa [#allocation5], 0
    // Predicated region
    $region2: #{tpu_custom_call.1} parent=1 // pred_check
      _
    $region3: #{tpu_custom_call.1} parent=1 // pred_check_branch
      %11 = sbr.rel (0) target = $region5
    $region4: #{tpu_custom_call.1} parent=1 // pred_region
      %13 = vsyncadd [#allocation4], 0
      %s15 = sshll.u32 %s0, 4
      %s16 = int_to_ptr.hbm [resolvable:$true] %s15
      %s17 = sshll.u32 [#allocation3], 4
      %s18 = int_to_ptr.vmem [resolvable:$true] %s17
      %20 = dma.hbm_to_vmem [thread:$0]  %s16, 256, %s18, [#allocation4]
    $region5: #{tpu_custom_call.1} parent=1 // pred_fallthru
      _
    // Predicated region
    $region6: #{tpu_custom_call.1} parent=1 // pred_check
      _
    $region7: #{tpu_custom_call.1} parent=1 // pred_check_branch
      %22 = sbr.rel (0) target = $region9
    $region8: #{tpu_custom_call.1} parent=1 // pred_region
      %24 = vsyncadd [#allocation7], 0
      %s26 = sshll.u32 %s1, 4
      %s27 = int_to_ptr.hbm [resolvable:$true] %s26
      %s28 = sshll.u32 [#allocation6], 4
      %s29 = int_to_ptr.vmem [resolvable:$true] %s28
      %31 = dma.hbm_to_vmem [thread:$0]  %s27, 256, %s29, [#allocation7]
    $region9: #{tpu_custom_call.1} parent=1 // pred_fallthru
      _
    // Predicated region
    $region10: #{tpu_custom_call.1} parent=1 // pred_check
      _
    $region11: #{tpu_custom_call.1} parent=1 // pred_check_branch
      %33 = sbr.rel (0) target = $region13
    $region12: #{tpu_custom_call.1} parent=1 // pred_region
      %35 = dma.done [#allocation4], 256
    $region13: #{tpu_custom_call.1} parent=1 // pred_fallthru
      _
    // Predicated region
    $region14: #{tpu_custom_call.1} parent=1 // pred_check
      _
    $region15: #{tpu_custom_call.1} parent=1 // pred_check_branch
      %37 = sbr.rel (0) target = $region17
    $region16: #{tpu_custom_call.1} parent=1 // pred_region
      %39 = dma.done [#allocation7], 256
    $region17: #{tpu_custom_call.1} parent=1 // pred_fallthru
      _
    %p40 = scmp.eq.s32.totalorder 0, 0
    // Predicated region
    $region18: #{tpu_custom_call.1} parent=1 // pred_check
      %p41 = pneg %p40
    $region19: #{tpu_custom_call.1} parent=1 // pred_check_branch
      %43 = sbr.rel (%p41) target = $region21
    $region20: #{tpu_custom_call.1} parent=1 // pred_region
      %v44 = vlaneseq
      %vm45 = vcmp.ge.s32.totalorder %v44, 0
      %vm46 = vcmp.lt.s32.totalorder %v44, 512
      %vm47 = vmand %vm45, %vm46
      %48 = vst.msk [vmem:[#allocation2] sm:$0xf] %vm47, 0.0
    $region21: #{tpu_custom_call.1} parent=1 // pred_fallthru
      _
    %v49 = vld [vmem:[#allocation3] sm:$0xff]
    %v50 = vld [vmem:[#allocation3 + $0x8] sm:$0xff]
    %v51 = vld [vmem:[#allocation6] sm:$0xff]
    %v52 = vld [vmem:[#allocation6 + $0x8] sm:$0xff]
    %v53 = vsub.f32 %v49, %v51
    %v54 = vsub.f32 %v50, %v52
    %v55 = vmul.f32 %v53, %v53
    %v56 = vmul.f32 %v54, %v54
    %v57 = vld [vmem:[#allocation2] sm:$0xf]
    %60 = vst [vmem:[#allocation1] ss:$2 sm:$0xff] %v55
    %s61 = scalar_lea.vmem [#allocation1], 16
    %62 = vst [vmem:[%s61] ss:$2 sm:$0xff] %v56
    %v63 = vld.sshfl [vmem:[#allocation1] sm:$0xff pattern:$0x75316420]
    %v64 = vld.sshfl [vmem:[#allocation1 + $0x8] sm:$0xff pattern:$0x75316420]
    %v65 = vld.sshfl [vmem:[#allocation1 + $0x10] sm:$0xff pattern:$0x75316420]
    %v66 = vld.sshfl [vmem:[#allocation1 + $0x18] sm:$0xff pattern:$0x75316420]
    %vm71 = vcmask 1043456
    %v72 = vsel %vm71, %v63, 0.0
    %v73 = vrot.slane %v72, 4
    %v74 = vadd.f32 %v72, %v73
    %v75 = vrot.slane %v74, 2
    %v76 = vadd.f32 %v74, %v75
    %v77 = vrot.slane %v76, 1
    %v78 = vadd.f32 %v76, %v77
    %v79 = vsel %vm71, %v64, 0.0
    %v80 = vrot.slane %v79, 4
    %v81 = vadd.f32 %v79, %v80
    %v82 = vrot.slane %v81, 2
    %v83 = vadd.f32 %v81, %v82
    %v84 = vrot.slane %v83, 1
    %v85 = vadd.f32 %v83, %v84
    %v86 = vsel %vm71, %v65, 0.0
    %v87 = vrot.slane %v86, 4
    %v88 = vadd.f32 %v86, %v87
    %v89 = vrot.slane %v88, 2
    %v90 = vadd.f32 %v88, %v89
    %v91 = vrot.slane %v90, 1
    %v92 = vadd.f32 %v90, %v91
    %v93 = vsel %vm71, %v66, 0.0
    %v94 = vrot.slane %v93, 4
    %v95 = vadd.f32 %v93, %v94
    %v96 = vrot.slane %v95, 2
    %v97 = vadd.f32 %v95, %v96
    %v98 = vrot.slane %v97, 1
    %v99 = vadd.f32 %v97, %v98
    %v104 = vrot.slane %v85, 7
    %v105 = vrot.slane %v92, 6
    %v106 = vrot.slane %v99, 5
    %vm107 = vcmask 1040384
    %v108 = vsel %vm107, %v78, %v104
    %vm109 = vcmask 1042434
    %v110 = vsel %vm109, %v105, %v106
    %vm111 = vcmask 1041408
    %v112 = vsel %vm111, %v108, %v110
    %v114 = vadd.f32 %v57, %v112
    %v115 = vlaneseq
    %vm116 = vcmp.ge.s32.totalorder %v115, 0
    %vm117 = vcmp.lt.s32.totalorder %v115, 512
    %vm118 = vmand %vm116, %vm117
    %119 = vst.msk [vmem:[#allocation2] sm:$0xf] %vm118, %v114
    // Predicated region
    $region22: #{tpu_custom_call.1} parent=1 // pred_check
      %p120 = pneg %p40
    $region23: #{tpu_custom_call.1} parent=1 // pred_check_branch
      %122 = sbr.rel (%p120) target = $region25
    $region24: #{tpu_custom_call.1} parent=1 // pred_region
      %v123 = vld [vmem:[#allocation2] sm:$0xf]
      %v125 = vperm.slane %v123, 0
      %v126 = vperm.slane %v123, 1
      %v127 = vperm.slane %v123, 2
      %v128 = vperm.slane %v123, 3
      %v133 = vsel %vm107, %v125, 0.0
      %v134 = vsel %vm107, %v126, 0.0
      %v135 = vadd.f32 %v133, %v134
      %v136 = vsel %vm107, %v127, 0.0
      %v137 = vadd.f32 %v135, %v136
      %v138 = vsel %vm107, %v128, 0.0
      %v139 = vadd.f32 %v137, %v138
      %140 = vadd.xlane.f32.xlu0 %v139
      %v141 = vpop.xlane.xlu0 %140
      %v142 = vrot.slane %v141, 4
      %v143 = vadd.f32 %v141, %v142
      %v144 = vrot.slane %v143, 2
      %v145 = vadd.f32 %v143, %v144
      %v146 = vrot.slane %v145, 1
      %v147 = vadd.f32 %v145, %v146
      %s148 = vtos %v147
      %v149 = vstv %s148
      %v150 = vmul.f32 %v149, 4.8828125
      %vm151 = vcmask 0
      %152 = vst.msk [vmem:[#allocation8] sm:$0x1] %vm151, %v150
    $region25: #{tpu_custom_call.1} parent=1 // pred_fallthru
      _
    // Predicated region
    $region26: #{tpu_custom_call.1} parent=1 // pred_check
      _
    $region27: #{tpu_custom_call.1} parent=1 // pred_check_branch
      %154 = sbr.rel (0) target = $region29
    $region28: #{tpu_custom_call.1} parent=1 // pred_region
      %156 = vsyncadd [#allocation5], 0
      %s158 = sshll.u32 [#allocation8], 4
      %s159 = int_to_ptr.vmem [resolvable:$true] %s158
      %s160 = sshll.u32 %s2, 4
      %s161 = int_to_ptr.hbm [resolvable:$true] %s160
      %163 = dma.vmem_to_hbm [thread:$0]  %s159, 16, %s161, [#allocation5]
    $region29: #{tpu_custom_call.1} parent=1 // pred_fallthru
      _
    // Predicated region
    $region30: #{tpu_custom_call.1} parent=1 // pred_check
      _
    $region31: #{tpu_custom_call.1} parent=1 // pred_check_branch
      %165 = sbr.rel (0) target = $region33
    $region32: #{tpu_custom_call.1} parent=1 // pred_region
      %167 = dma.done [#allocation5], 16
    $region33: #{tpu_custom_call.1} parent=1 // pred_fallthru
      _
    %168 = vsyncpa [#allocation4], 1
    %169 = vsyncpa [#allocation7], 1
    %170 = vsyncpa [#allocation5], 1

</llo_original>
